<compile_context>
chip_gen: v6e
topology: v6e:2x2x1
jax: 0.10.0
libtpu: 0.0.40
codegen_flags: <defaults>
</compile_context>

<pallas_src>
import math

import jax
import jax.numpy as jnp
from jax.experimental import pallas as pl
from jax.experimental.pallas import tpu as pltpu

ACTION_NUM = 2
STATE_DIM = 4
_LANE = 128


def qnet_kernel(xt_ref, w1t_ref, b1_ref, w2t_ref, b2_ref, o_ref):
    xt = xt_ref[...]          # (S, tb)  batch on lanes
    w1t = w1t_ref[...]        # (H, S)
    s_dim = xt.shape[0]

    # ---- Layer 1 on the VPU ----------------------------------------------
    # h^T (H, tb) = sum_k outer(W1^T[:, k], X^T[k, :]).  K = 4 is far too small
    # for an MXU pass; each term is a rank-1 multiply-add where the x row is a
    # stride-0 sublane broadcast and the weight column a small lane broadcast.
    acc = w1t[:, 0:1] * xt[0:1, :]                       # (H, tb)
    for k in range(1, s_dim):
        acc = acc + w1t[:, k:k + 1] * xt[k:k + 1, :]
    h = jnp.maximum(acc + b1_ref[...], 0.0)              # bias + ReLU, f32 VPU

    # ---- Layer 2 on the MXU ----------------------------------------------
    # out^T (A, tb) = W2^T (A, H) @ h^T (H, tb): the contraction over H stays on
    # the MXU with an f32 accumulator and N = tb lands on the result lanes, so
    # the store below is a full-width, unmasked vst.
    out_t = jnp.dot(w2t_ref[...], h, preferred_element_type=jnp.float32)
    o_ref[...] = (out_t + b2_ref[...]).astype(o_ref.dtype)


def _round_up(n, m):
    return ((n + m - 1) // m) * m


def qnet_forward(x, w1, b1, w2, b2, *, tile_b=2048):
    """x: (B, state_dim) f32; w1: (state_dim, H); b1: (H,); w2: (H, A); b2: (A,)."""
    B, S = x.shape
    H = w1.shape[1]
    A = w2.shape[1]

    # Batch tile: multiple of 128 lanes, capped at tile_b.
    tb = min(_round_up(tile_b, _LANE), _round_up(B, _LANE))
    # v7x has 2 TensorCores: split a large single-tile batch into >=2 parallel
    # grid steps so the second core isn't idle (harmless elsewhere).
    if _round_up(B, tb) // tb == 1 and tb >= 1024:
        tb = _round_up(tb // 2, _LANE)
    B_pad = _round_up(B, tb)
    grid = (B_pad // tb,)

    # Lane-dense layouts: batch on the lane axis for both input and output.
    x_t = jnp.pad(x, ((0, B_pad - B), (0, 0))).T          # (S, B_pad)
    w1_t = w1.T                                           # (H, S)
    b1_c = b1.reshape(H, 1)
    w2_t = w2.T                                           # (A, H)
    b2_c = b2.reshape(A, 1)

    # Weights/biases: constant block index -> stay resident in VMEM across steps.
    const = lambda shape: pl.BlockSpec(shape, lambda i: tuple(0 for _ in shape))

    itemsize = jnp.dtype(x.dtype).itemsize
    flops = 2 * B_pad * H * (S + A)
    bytes_accessed = (
        (S * B_pad + A * B_pad) * itemsize
        + (w1.size + b1.size + w2.size + b2.size) * 4
    )

    out_t = pl.pallas_call(
        qnet_kernel,
        out_shape=jax.ShapeDtypeStruct((A, B_pad), x.dtype),
        grid_spec=pl.GridSpec(
            grid=grid,
            in_specs=[
                pl.BlockSpec((S, tb), lambda i: (0, i)),  # X^T: batch-tiled on lanes
                const(w1_t.shape),
                const(b1_c.shape),
                const(w2_t.shape),
                const(b2_c.shape),
            ],
            out_specs=pl.BlockSpec((A, tb), lambda i: (0, i)),
        ),
        compiler_params=pltpu.CompilerParams(
            dimension_semantics=("parallel",),            # 2-TC sharding on v7x
        ),
        cost_estimate=pl.CostEstimate(
            flops=flops, transcendentals=0, bytes_accessed=bytes_accessed
        ),
    )(x_t, w1_t, b1_c, w2_t, b2_c)
    return out_t[:, :B].T


def init_qnet_params(key, hidden_dim, state_dim=STATE_DIM, action_dim=ACTION_NUM):
    """Deterministic init matching nn.Linear's default U(-1/sqrt(fan_in), 1/sqrt(fan_in)).
    Weights returned already transposed to (in, out)."""
    k1, k2, k3, k4 = jax.random.split(key, 4)
    bound1 = 1.0 / math.sqrt(state_dim)
    bound2 = 1.0 / math.sqrt(hidden_dim)
    w1 = jax.random.uniform(k1, (state_dim, hidden_dim), jnp.float32, -bound1, bound1)
    b1 = jax.random.uniform(k2, (hidden_dim,), jnp.float32, -bound1, bound1)
    w2 = jax.random.uniform(k3, (hidden_dim, action_dim), jnp.float32, -bound2, bound2)
    b2 = jax.random.uniform(k4, (action_dim,), jnp.float32, -bound2, bound2)
    return w1, b1, w2, b2


def _ref(x, w1, b1, w2, b2):
    return jnp.maximum(x @ w1 + b1, 0.0) @ w2 + b2


if __name__ == "__main__":
    key = jax.random.PRNGKey(0)
    k_params, k_x1, k_x2, k_x3 = jax.random.split(key, 4)

    hidden_dim = 32
    w1, b1, w2, b2 = init_qnet_params(k_params, hidden_dim)

    # Case 1: small batch (single grid step).
    batch = 8
    x = jax.random.normal(k_x1, (batch, STATE_DIM), jnp.float32)
    out = jax.block_until_ready(qnet_forward(x, w1, b1, w2, b2))
    assert out.shape == (batch, ACTION_NUM)
    assert jnp.allclose(out, _ref(x, w1, b1, w2, b2), atol=1e-5, rtol=1e-5)

    # Case 2: ragged batch (exercises the pad/slice path).
    batch2 = 5
    x2 = jax.random.normal(k_x2, (batch2, STATE_DIM), jnp.float32)
    out2 = jax.block_until_ready(qnet_forward(x2, w1, b1, w2, b2))
    assert out2.shape == (batch2, ACTION_NUM)
    assert jnp.allclose(out2, _ref(x2, w1, b1, w2, b2), atol=1e-5, rtol=1e-5)

    # Case 3: multi-step grid (exercises the batch-tiled index_maps).
    batch3 = 300
    x3 = jax.random.normal(k_x3, (batch3, STATE_DIM), jnp.float32)
    out3 = jax.block_until_ready(qnet_forward(x3, w1, b1, w2, b2, tile_b=128))
    assert out3.shape == (batch3, ACTION_NUM)
    assert jnp.allclose(out3, _ref(x3, w1, b1, w2, b2), atol=1e-5, rtol=1e-5)

    print("KERNEL_OK")
</pallas_src>

<mosaic_0001>
module attributes {stable_mosaic.version = 11 : i64} {
  func.func @qnet_kernel(%arg0: i32, %arg1: memref<4x128xf32, #tpu.memory_space<vmem>>, %arg2: memref<32x4xf32, #tpu.memory_space<vmem>>, %arg3: memref<32x1xf32, #tpu.memory_space<vmem>>, %arg4: memref<2x32xf32, #tpu.memory_space<vmem>>, %arg5: memref<2x1xf32, #tpu.memory_space<vmem>>, %arg6: memref<2x128xf32, #tpu.memory_space<vmem>>) attributes {dimension_semantics = [#tpu.dimension_semantics<parallel>], iteration_bounds = array<i64: 1>, scalar_prefetch = 0 : i64, scratch_operands = 0 : i64, tpu.core_type = #tpu.core_type<tc>, window_params = [{transform_indices = @transform_0, window_bounds = array<i64: 4, 128>}, {pipeline_mode = #tpu.pipeline_mode<synchronous>, transform_indices = @transform_1, window_bounds = array<i64: 32, 4>}, {pipeline_mode = #tpu.pipeline_mode<synchronous>, transform_indices = @transform_2, window_bounds = array<i64: 32, 1>}, {pipeline_mode = #tpu.pipeline_mode<synchronous>, transform_indices = @transform_3, window_bounds = array<i64: 2, 32>}, {pipeline_mode = #tpu.pipeline_mode<synchronous>, transform_indices = @transform_4, window_bounds = array<i64: 2, 1>}, {transform_indices = @transform_5, window_bounds = array<i64: 2, 128>}]} {
    %c0 = arith.constant 0 : index
    %c0_0 = arith.constant 0 : index
    %0 = vector.load %arg1[%c0, %c0_0] : memref<4x128xf32, #tpu.memory_space<vmem>>, vector<4x128xf32>
    %c0_1 = arith.constant 0 : index
    %c0_2 = arith.constant 0 : index
    %1 = vector.load %arg2[%c0_1, %c0_2] : memref<32x4xf32, #tpu.memory_space<vmem>>, vector<32x4xf32>
    %2 = vector.extract_strided_slice %1 {offsets = [0, 0], sizes = [32, 1], strides = [1, 1]} : vector<32x4xf32> to vector<32x1xf32>
    %3 = vector.extract_strided_slice %0 {offsets = [0, 0], sizes = [1, 128], strides = [1, 1]} : vector<4x128xf32> to vector<1x128xf32>
    %4 = vector.broadcast %2 : vector<32x1xf32> to vector<32x128xf32>
    %5 = vector.broadcast %3 : vector<1x128xf32> to vector<32x128xf32>
    %6 = arith.mulf %4, %5 : vector<32x128xf32>
    %7 = vector.extract_strided_slice %1 {offsets = [0, 1], sizes = [32, 1], strides = [1, 1]} : vector<32x4xf32> to vector<32x1xf32>
    %8 = vector.extract_strided_slice %0 {offsets = [1, 0], sizes = [1, 128], strides = [1, 1]} : vector<4x128xf32> to vector<1x128xf32>
    %9 = vector.broadcast %7 : vector<32x1xf32> to vector<32x128xf32>
    %10 = vector.broadcast %8 : vector<1x128xf32> to vector<32x128xf32>
    %11 = arith.mulf %9, %10 : vector<32x128xf32>
    %12 = arith.addf %6, %11 : vector<32x128xf32>
    %13 = vector.extract_strided_slice %1 {offsets = [0, 2], sizes = [32, 1], strides = [1, 1]} : vector<32x4xf32> to vector<32x1xf32>
    %14 = vector.extract_strided_slice %0 {offsets = [2, 0], sizes = [1, 128], strides = [1, 1]} : vector<4x128xf32> to vector<1x128xf32>
    %15 = vector.broadcast %13 : vector<32x1xf32> to vector<32x128xf32>
    %16 = vector.broadcast %14 : vector<1x128xf32> to vector<32x128xf32>
    %17 = arith.mulf %15, %16 : vector<32x128xf32>
    %18 = arith.addf %12, %17 : vector<32x128xf32>
    %19 = vector.extract_strided_slice %1 {offsets = [0, 3], sizes = [32, 1], strides = [1, 1]} : vector<32x4xf32> to vector<32x1xf32>
    %20 = vector.extract_strided_slice %0 {offsets = [3, 0], sizes = [1, 128], strides = [1, 1]} : vector<4x128xf32> to vector<1x128xf32>
    %21 = vector.broadcast %19 : vector<32x1xf32> to vector<32x128xf32>
    %22 = vector.broadcast %20 : vector<1x128xf32> to vector<32x128xf32>
    %23 = arith.mulf %21, %22 : vector<32x128xf32>
    %24 = arith.addf %18, %23 : vector<32x128xf32>
    %c0_3 = arith.constant 0 : index
    %c0_4 = arith.constant 0 : index
    %25 = vector.load %arg3[%c0_3, %c0_4] : memref<32x1xf32, #tpu.memory_space<vmem>>, vector<32x1xf32>
    %26 = vector.broadcast %25 : vector<32x1xf32> to vector<32x128xf32>
    %27 = arith.addf %24, %26 : vector<32x128xf32>
    %cst = arith.constant 0.000000e+00 : f32
    %28 = vector.broadcast %cst : f32 to vector<32x128xf32>
    %29 = arith.maximumf %27, %28 : vector<32x128xf32>
    %c0_5 = arith.constant 0 : index
    %c0_6 = arith.constant 0 : index
    %30 = vector.load %arg4[%c0_5, %c0_6] : memref<2x32xf32, #tpu.memory_space<vmem>>, vector<2x32xf32>
    %cst_7 = arith.constant dense<0.000000e+00> : vector<2x128xf32>
    %31 = tpu.matmul %30, %29, %cst_7 {dimension_numbers = #tpu.dot_dimension_numbers<[1], [0], [0], [1], [0, 0, 1, 1], [], []>} : vector<2x32xf32>, vector<32x128xf32>, vector<2x128xf32> -> vector<2x128xf32>
    %c0_8 = arith.constant 0 : index
    %c0_9 = arith.constant 0 : index
    %32 = vector.load %arg5[%c0_8, %c0_9] : memref<2x1xf32, #tpu.memory_space<vmem>>, vector<2x1xf32>
    %33 = vector.broadcast %32 : vector<2x1xf32> to vector<2x128xf32>
    %34 = arith.addf %31, %33 : vector<2x128xf32>
    %c0_10 = arith.constant 0 : index
    %c0_11 = arith.constant 0 : index
    %35 = vector.load %arg6[%c0_10, %c0_11] : memref<2x128xf32, #tpu.memory_space<vmem>>, vector<2x128xf32>
    tpu.vector_store %arg6[%c0_10, %c0_11], %34 {strides = array<i32>} : memref<2x128xf32, #tpu.memory_space<vmem>>, vector<2x128xf32>,
    return
  }
  func.func @transform_0(%arg0: i32) -> (i32, i32) {
    %c0_i32 = arith.constant 0 : i32
    %c0_i32_0 = arith.constant 0 : i32
    return %c0_i32, %arg0 : i32, i32
  }
  func.func @transform_1(%arg0: i32) -> (i32, i32) {
    %c0_i32 = arith.constant 0 : i32
    %c0_i32_0 = arith.constant 0 : i32
    %c0_i32_1 = arith.constant 0 : i32
    return %c0_i32, %c0_i32_0 : i32, i32
  }
  func.func @transform_2(%arg0: i32) -> (i32, i32) {
    %c0_i32 = arith.constant 0 : i32
    %c0_i32_0 = arith.constant 0 : i32
    %c0_i32_1 = arith.constant 0 : i32
    return %c0_i32, %c0_i32_0 : i32, i32
  }
  func.func @transform_3(%arg0: i32) -> (i32, i32) {
    %c0_i32 = arith.constant 0 : i32
    %c0_i32_0 = arith.constant 0 : i32
    %c0_i32_1 = arith.constant 0 : i32
    return %c0_i32, %c0_i32_0 : i32, i32
  }
  func.func @transform_4(%arg0: i32) -> (i32, i32) {
    %c0_i32 = arith.constant 0 : i32
    %c0_i32_0 = arith.constant 0 : i32
    %c0_i32_1 = arith.constant 0 : i32
    return %c0_i32, %c0_i32_0 : i32, i32
  }
  func.func @transform_5(%arg0: i32) -> (i32, i32) {
    %c0_i32 = arith.constant 0 : i32
    %c0_i32_0 = arith.constant 0 : i32
    return %c0_i32, %arg0 : i32, i32
  }
}

</mosaic_0001>

<llo_original>
// kernel: tpu_custom_call.1
$region0: #{tpu_custom_call.1}
  #allocation0 [shape = 'u32[]', space=smem, size = 0x4, offset = 0x4, fixed_abs, tag = 'smem constant byte address 0x4 - core index']
  #allocation1 [shape = 'u32[144,128]{1,0:T(1,128)}', space=vmem, size = 0x12000, scoped, tag = 'internal scratch']
  %s0 = inlined_call_operand.vmem [shape: f32[4,128], index: 0, kind: input, shape index: {}]
  %s1 = inlined_call_operand.vmem [shape: f32[32,4], index: 1, kind: input, shape index: {}]
  %s2 = inlined_call_operand.vmem [shape: f32[32,1], index: 2, kind: input, shape index: {}]
  %s3 = inlined_call_operand.vmem [shape: f32[2,32], index: 3, kind: input, shape index: {}]
  %s4 = inlined_call_operand.vmem [shape: f32[2,1], index: 4, kind: input, shape index: {}]
  %s5 = inlined_call_operand.hbm [shape: f32[2,128], index: 5, kind: output, shape index: {}]
  %s6 = sld [smem:[#allocation0]]
  $region30: #{tpu_custom_call.1} parent=0
    _
  %s8 = ssub.s32 1, %s6
  %s9 = scalar_select 0, %s8, %s6
  $region1: #{tpu_custom_call.1} parent=0
    #allocation2 [shape = 'u8[1024]{0}', space=vmem, size = 0x400, scoped, tag = 'output window, operand 0, single buffered']
    #allocation3 [shape = 's32[1]{0}', space=sflag, size = 0x4, scoped, tag = 'scoped memory for tpu_custom_call.1']
    %10 = vsyncpa [#allocation3], 0
    // Predicated region
    $region2: #{tpu_custom_call.1} parent=1 // pred_check
      _
    $region3: #{tpu_custom_call.1} parent=1 // pred_check_branch
      %12 = sbr.rel (0) target = $region5
    $region4: #{tpu_custom_call.1} parent=1 // pred_region
      _
    $region5: #{tpu_custom_call.1} parent=1 // pred_fallthru
      _
    // Predicated region
    $region6: #{tpu_custom_call.1} parent=1 // pred_check
      _
    $region7: #{tpu_custom_call.1} parent=1 // pred_check_branch
      %14 = sbr.rel (0) target = $region9
    $region8: #{tpu_custom_call.1} parent=1 // pred_region
      _
    $region9: #{tpu_custom_call.1} parent=1 // pred_fallthru
      _
    // Predicated region
    $region10: #{tpu_custom_call.1} parent=1 // pred_check
      _
    $region11: #{tpu_custom_call.1} parent=1 // pred_check_branch
      %16 = sbr.rel (0) target = $region13
    $region12: #{tpu_custom_call.1} parent=1 // pred_region
      _
    $region13: #{tpu_custom_call.1} parent=1 // pred_fallthru
      _
    // Predicated region
    $region14: #{tpu_custom_call.1} parent=1 // pred_check
      _
    $region15: #{tpu_custom_call.1} parent=1 // pred_check_branch
      %18 = sbr.rel (0) target = $region17
    $region16: #{tpu_custom_call.1} parent=1 // pred_region
      _
    $region17: #{tpu_custom_call.1} parent=1 // pred_fallthru
      _
    // Predicated region
    $region18: #{tpu_custom_call.1} parent=1 // pred_check
      _
    $region19: #{tpu_custom_call.1} parent=1 // pred_check_branch
      %20 = sbr.rel (0) target = $region21
    $region20: #{tpu_custom_call.1} parent=1 // pred_region
      _
    $region21: #{tpu_custom_call.1} parent=1 // pred_fallthru
      _
    %v21 = vld [vmem:[%s0] sm:$0xf]
    %v22 = vld [vmem:[%s1] sm:$0xff]
    %v23 = vld [vmem:[%s1 + $0x8] sm:$0xff]
    %v24 = vld [vmem:[%s1 + $0x10] sm:$0xff]
    %v25 = vld [vmem:[%s1 + $0x18] sm:$0xff]
    %27 = vset.pattern.permute.xlu0 0
    %28 = vperm.xlu0 %27, %v22
    %v29 = vpop.permute.xlu0 %28
    %32 = vset.pattern.permute.xlu0 0
    %33 = vperm.xlu0 %32, %v23
    %v34 = vpop.permute.xlu0 %33
    %37 = vset.pattern.permute.xlu0 0
    %38 = vperm.xlu0 %37, %v24
    %v39 = vpop.permute.xlu0 %38
    %42 = vset.pattern.permute.xlu0 0
    %43 = vperm.xlu0 %42, %v25
    %v44 = vpop.permute.xlu0 %43
    %v46 = vlaneseq
    %v47 = vshrl.u32 %v46, 7
    %v48 = vsub.s32 0, %v47
    %v49 = vrot.slane %v21, %v48
    %v50 = vmul.f32 %v29, %v49
    %v51 = vmul.f32 %v34, %v49
    %v52 = vmul.f32 %v39, %v49
    %v53 = vmul.f32 %v44, %v49
    %54 = vset.pattern.permute.xlu0 1
    %55 = vperm.xlu0 %54, %v22
    %v56 = vpop.permute.xlu0 %55
    %58 = vset.pattern.permute.xlu0 1
    %59 = vperm.xlu0 %58, %v23
    %v60 = vpop.permute.xlu0 %59
    %62 = vset.pattern.permute.xlu0 1
    %63 = vperm.xlu0 %62, %v24
    %v64 = vpop.permute.xlu0 %63
    %66 = vset.pattern.permute.xlu0 1
    %67 = vperm.xlu0 %66, %v25
    %v68 = vpop.permute.xlu0 %67
    %v70 = vlaneseq
    %v71 = vshrl.u32 %v70, 7
    %v72 = vsub.s32 1, %v71
    %v73 = vrot.slane %v21, %v72
    %v74 = vmul.f32 %v56, %v73
    %v75 = vmul.f32 %v60, %v73
    %v76 = vmul.f32 %v64, %v73
    %v77 = vmul.f32 %v68, %v73
    %v78 = vadd.f32 %v50, %v74
    %v79 = vadd.f32 %v51, %v75
    %v80 = vadd.f32 %v52, %v76
    %v81 = vadd.f32 %v53, %v77
    %82 = vset.pattern.permute.xlu0 2
    %83 = vperm.xlu0 %82, %v22
    %v84 = vpop.permute.xlu0 %83
    %86 = vset.pattern.permute.xlu0 2
    %87 = vperm.xlu0 %86, %v23
    %v88 = vpop.permute.xlu0 %87
    %90 = vset.pattern.permute.xlu0 2
    %91 = vperm.xlu0 %90, %v24
    %v92 = vpop.permute.xlu0 %91
    %94 = vset.pattern.permute.xlu0 2
    %95 = vperm.xlu0 %94, %v25
    %v96 = vpop.permute.xlu0 %95
    %v98 = vlaneseq
    %v99 = vshrl.u32 %v98, 7
    %v100 = vsub.s32 2, %v99
    %v101 = vrot.slane %v21, %v100
    %v102 = vmul.f32 %v84, %v101
    %v103 = vmul.f32 %v88, %v101
    %v104 = vmul.f32 %v92, %v101
    %v105 = vmul.f32 %v96, %v101
    %v106 = vadd.f32 %v78, %v102
    %v107 = vadd.f32 %v79, %v103
    %v108 = vadd.f32 %v80, %v104
    %v109 = vadd.f32 %v81, %v105
    %110 = vset.pattern.permute.xlu0 3
    %111 = vperm.xlu0 %110, %v22
    %v112 = vpop.permute.xlu0 %111
    %114 = vset.pattern.permute.xlu0 3
    %115 = vperm.xlu0 %114, %v23
    %v116 = vpop.permute.xlu0 %115
    %118 = vset.pattern.permute.xlu0 3
    %119 = vperm.xlu0 %118, %v24
    %v120 = vpop.permute.xlu0 %119
    %122 = vset.pattern.permute.xlu0 3
    %123 = vperm.xlu0 %122, %v25
    %v124 = vpop.permute.xlu0 %123
    %v126 = vlaneseq
    %v127 = vshrl.u32 %v126, 7
    %v128 = vsub.s32 3, %v127
    %v129 = vrot.slane %v21, %v128
    %v130 = vmul.f32 %v112, %v129
    %v131 = vmul.f32 %v116, %v129
    %v132 = vmul.f32 %v120, %v129
    %v133 = vmul.f32 %v124, %v129
    %v134 = vadd.f32 %v106, %v130
    %v135 = vadd.f32 %v107, %v131
    %v136 = vadd.f32 %v108, %v132
    %v137 = vadd.f32 %v109, %v133
    %v138 = vld [vmem:[%s2] sm:$0xff]
    %v139 = vld [vmem:[%s2 + $0x8] sm:$0xff]
    %v140 = vld [vmem:[%s2 + $0x10] sm:$0xff]
    %v141 = vld [vmem:[%s2 + $0x18] sm:$0xff]
    %143 = vset.pattern.permute.xlu0 0
    %144 = vperm.xlu0 %143, %v138
    %v145 = vpop.permute.xlu0 %144
    %148 = vset.pattern.permute.xlu0 0
    %149 = vperm.xlu0 %148, %v139
    %v150 = vpop.permute.xlu0 %149
    %153 = vset.pattern.permute.xlu0 0
    %154 = vperm.xlu0 %153, %v140
    %v155 = vpop.permute.xlu0 %154
    %158 = vset.pattern.permute.xlu0 0
    %159 = vperm.xlu0 %158, %v141
    %v160 = vpop.permute.xlu0 %159
    %v162 = vadd.f32 %v134, %v145
    %v163 = vadd.f32 %v135, %v150
    %v164 = vadd.f32 %v136, %v155
    %v165 = vadd.f32 %v137, %v160
    %v166 = vmax.f32 %v162, 0.0
    %v167 = vmax.f32 %v163, 0.0
    %v168 = vmax.f32 %v164, 0.0
    %v169 = vmax.f32 %v165, 0.0
    %v170 = vld [vmem:[%s3] sm:$0x3]
    %v171 = vld [vmem:[%s4] sm:$0x3]
    %173 = vset.pattern.permute.xlu0 0
    %174 = vperm.xlu0 %173, %v171
    %v175 = vpop.permute.xlu0 %174
    %vm177 = vcmask 261120
    %v179 = vsel %vm177, %v170, 0
    %181 = vmatprep.subr.mxu0 0.0
    %182 = vmatpush1.msra.mxu0 0.0
    %183 = vmatprep.subr.mxu0 0.0
    %184 = vmatpush1.msra.mxu0 0.0
    %185 = vmatprep.subr.mxu0 0.0
    %186 = vmatpush1.msra.mxu0 0.0
    %187 = vmatprep.subr.mxu0 0.0
    %188 = vmatpush1.msra.mxu0 0.0
    %189 = vmatprep.subr.mxu0 0.0
    %190 = vmatpush1.msra.mxu0 0.0
    %191 = vmatprep.subr.mxu0 0.0
    %192 = vmatpush1.msra.mxu0 0.0
    %193 = vmatprep.subr.mxu0 0.0
    %194 = vmatpush1.msra.mxu0 0.0
    %195 = vmatprep.subr.mxu0 0.0
    %196 = vmatpush1.msra.mxu0 0.0
    %197 = vmatprep.subr.mxu0 0.0
    %198 = vmatpush1.msra.mxu0 0.0
    %199 = vmatprep.subr.mxu0 0.0
    %200 = vmatpush1.msra.mxu0 0.0
    %201 = vmatprep.subr.mxu0 0.0
    %202 = vmatpush1.msra.mxu0 0.0
    %203 = vmatprep.subr.mxu0 0.0
    %204 = vmatpush1.msra.mxu0 0.0
    %205 = vmatprep.subr.mxu0 0.0
    %206 = vmatpush1.msra.mxu0 %v169
    %207 = vmatprep.subr.mxu0 0.0
    %208 = vmatpush1.msra.mxu0 %v168
    %209 = vmatprep.subr.mxu0 0.0
    %210 = vmatpush1.msra.mxu0 %v167
    %211 = vmatprep.subr.mxu0 0.0
    %212 = vmatpush1.msra.mxu0 %v166
    %213 = vmatprep.subr.mxu0 0.0
    %214 = vmatpush2.msra.mxu0 0.0
    %215 = vmatprep.subr.mxu0 0.0
    %216 = vmatpush2.msra.mxu0 0.0
    %217 = vmatprep.subr.mxu0 0.0
    %218 = vmatpush2.msra.mxu0 0.0
    %219 = vmatprep.subr.mxu0 0.0
    %220 = vmatpush2.msra.mxu0 0.0
    %221 = vmatprep.subr.mxu0 0.0
    %222 = vmatpush2.msra.mxu0 0.0
    %223 = vmatprep.subr.mxu0 0.0
    %224 = vmatpush2.msra.mxu0 0.0
    %225 = vmatprep.subr.mxu0 0.0
    %226 = vmatpush2.msra.mxu0 0.0
    %227 = vmatprep.subr.mxu0 0.0
    %228 = vmatpush2.msra.mxu0 0.0
    %229 = vmatprep.subr.mxu0 0.0
    %230 = vmatpush2.msra.mxu0 0.0
    %231 = vmatprep.subr.mxu0 0.0
    %232 = vmatpush2.msra.mxu0 0.0
    %233 = vmatprep.subr.mxu0 0.0
    %234 = vmatpush2.msra.mxu0 0.0
    %235 = vmatprep.subr.mxu0 0.0
    %236 = vmatpush2.msra.mxu0 0.0
    %237 = vmatprep.subr.mxu0 0.0
    %238 = vmatpush2.msra.mxu0 0.0
    %239 = vmatprep.subr.mxu0 0.0
    %240 = vmatpush2.msra.mxu0 0.0
    %241 = vmatprep.subr.mxu0 0.0
    %242 = vmatpush2.msra.mxu0 0.0
    %243 = vmatprep.subr.mxu0 0.0
    %244 = vmatpush2.msra.mxu0 0.0
    %245 = vmatprep.mubr.f32.mxu0 0.0
    %246 = vmatmul.mubr.f32.gmra.mxu0 %v179
    %v247 = vpop.f32.mrf.mxu0
    %v248 = vadd.f32 %v175, %v247
    %v249 = vpop.f32.mrf.mxu0
    %250 = vdwg.mxu0
    %251 = vst [vmem:[#allocation2] sm:$0x3] %v248
    // Predicated region
    $region22: #{tpu_custom_call.1} parent=1 // pred_check
      _
    $region23: #{tpu_custom_call.1} parent=1 // pred_check_branch
      %253 = sbr.rel (0) target = $region25
    $region24: #{tpu_custom_call.1} parent=1 // pred_region
      %s255 = ssub.s32 32, 32
      %256 = vsyncadd [#allocation3], %s255
      %s258 = sshll.u32 [#allocation2], 4
      %s259 = int_to_ptr.vmem [resolvable:$true] %s258
      %261 = dma.vmem_to_hbm [thread:$0]  %s259, 32, %s5, [#allocation3]
    $region25: #{tpu_custom_call.1} parent=1 // pred_fallthru
      _
    // Predicated region
    $region26: #{tpu_custom_call.1} parent=1 // pred_check
      _
    $region27: #{tpu_custom_call.1} parent=1 // pred_check_branch
      %263 = sbr.rel (0) target = $region29
    $region28: #{tpu_custom_call.1} parent=1 // pred_region
      %264 = dma.done [#allocation3], 32
    $region29: #{tpu_custom_call.1} parent=1 // pred_fallthru
      _
    %265 = vsyncpa [#allocation3], 1

</llo_original>
